<compile_context>
chip_gen: v5e
topology: v5e:2x2
jax: 0.10.0
libtpu: 0.0.40
codegen_flags: <defaults>
</compile_context>

<pallas_src>
import functools

import numpy as np
import jax
import jax.numpy as jnp
from jax.experimental import pallas as pl
from jax.experimental.pallas import tpu as pltpu

_LANE = 128
_SUBLANE = 8
_BLOCK_BYTES_CAP = 4 * 1024 * 1024  # per target block (f32); VMEM limit set explicitly


def _round_up(x, m):
    return ((x + m - 1) // m) * m


def _row_mse_kernel(gid_ref, preds_ref, tgt_ref, out_ref, acc_ref, *, inv_size):
    """Per-row MSE for a (row_block, feat_block) tile of target rows.

    gid_ref:   (TN, 1)   int32  group id per target row
    preds_ref: (Bp, FC)  f32    pred rows for feature chunk kc (zero-padded to Bp)
    tgt_ref:   (TN, FC)  f32    target rows for feature chunk kc
    out_ref:   (TN, 1)   f32    per-row mean squared error
    acc_ref:   (TN, 1)   f32    running per-row sum of squared diffs
    """
    kc = pl.program_id(1)

    @pl.when(kc == 0)
    def _():
        acc_ref[...] = jnp.zeros_like(acc_ref)

    gid = gid_ref[...]        # (TN, 1) int32
    preds = preds_ref[...]    # (Bp, FC) f32
    tgt = tgt_ref[...]        # (TN, FC) f32

    # Gather preds[gid[r]] per row on the MXU: one_hot(gid) @ preds.
    # 0/1 one-hot rows with HIGHEST precision reproduce the f32 pred values
    # exactly; the O(B) select work moves off the saturated VPU onto the MXU.
    b_iota = jax.lax.broadcasted_iota(jnp.int32, (tgt.shape[0], preds.shape[0]), 1)
    one_hot = (gid == b_iota).astype(jnp.float32)            # (TN, Bp)
    gathered = jax.lax.dot_general(
        one_hot, preds,
        dimension_numbers=(((1,), (0,)), ((), ())),
        preferred_element_type=jnp.float32,
        precision=jax.lax.Precision.HIGHEST)                 # (TN, FC)

    diff = tgt - gathered
    acc_ref[...] += jnp.sum(diff * diff, axis=1, keepdims=True)

    @pl.when(kc == pl.num_programs(1) - 1)
    def _():
        out_ref[...] = acc_ref[...] * inv_size


def _choose_blocks(n_rows, f_pad):
    """Pick (row_block, feat_block): row_block multiple of 8, feat_block
    multiple of 128, target block bytes <= _BLOCK_BYTES_CAP (f32)."""
    # Largest feature chunk such that even a minimal 8-row block fits the cap.
    max_feat = max(_LANE, (_BLOCK_BYTES_CAP // (4 * _SUBLANE) // _LANE) * _LANE)
    feat_block = min(f_pad, max_feat)
    # Rows: fill the cap, but never more than N rounded up to a sublane.
    rb = _BLOCK_BYTES_CAP // (feat_block * 4)
    rb = max(_SUBLANE, (rb // _SUBLANE) * _SUBLANE)
    rb = min(rb, _round_up(n_rows, _SUBLANE))
    return rb, feat_block


def _per_row_mse(preds, targets, group_ids_np, *, row_block=None, feat_block=None):
    """all_mse[i] = mean((preds[group_ids[i]] - targets[i])**2) over (S, D)."""
    B, S, D = preds.shape
    N = targets.shape[0]
    F = S * D
    F_pad = _round_up(F, _LANE)

    auto_rb, auto_fb = _choose_blocks(N, F_pad)
    if feat_block is None:
        feat_block = auto_fb
    feat_block = max(_LANE, (int(feat_block) // _LANE) * _LANE)
    if row_block is None:
        row_block = auto_rb
    row_block = max(_SUBLANE, (int(row_block) // _SUBLANE) * _SUBLANE)

    F_pad = _round_up(F_pad, feat_block)
    KC = F_pad // feat_block
    B_pad = _round_up(B, _SUBLANE)

    preds2 = preds.reshape(B, F).astype(jnp.float32)
    tgts2 = targets.reshape(N, F).astype(jnp.float32)
    if F_pad != F or B_pad != B:
        # Zero feature padding contributes 0 to the squared diff; zero pred
        # rows are never selected (gid < B always).
        preds2 = jnp.pad(preds2, ((0, B_pad - B), (0, F_pad - F)))
    if F_pad != F:
        tgts2 = jnp.pad(tgts2, ((0, 0), (0, F_pad - F)))

    N_pad = _round_up(N, row_block)
    G = N_pad // row_block
    if N_pad != N:
        tgts2 = jnp.pad(tgts2, ((0, N_pad - N), (0, 0)))
    gid_pad = np.zeros((N_pad,), dtype=np.int32)
    gid_pad[:N] = group_ids_np
    gid_col = jnp.asarray(gid_pad).reshape(N_pad, 1)

    kernel = functools.partial(_row_mse_kernel, inv_size=1.0 / float(F))

    # Explicit scoped-VMEM budget: 2x target block + 2x preds block + small
    # (gid/out/acc columns) + slack.  Clamped to [32 MiB, 64 MiB] so it is
    # valid on v5e (128 MiB phys), v6e (128 MiB) and v7x (64 MiB per TC).
    tgt_blk_bytes = row_block * feat_block * 4
    preds_blk_bytes = B_pad * feat_block * 4
    need = 2 * tgt_blk_bytes + 2 * preds_blk_bytes + 6 * row_block * 4 + (4 << 20)
    vmem_limit = int(min(max(need, 32 << 20), 64 << 20))

    cost = pl.CostEstimate(
        flops=3 * N_pad * F_pad + 2 * N_pad * B_pad * F_pad,
        transcendentals=0,
        bytes_accessed=4 * (N_pad * F_pad + G * B_pad * F_pad + 2 * N_pad),
    )

    out = pl.pallas_call(
        kernel,
        out_shape=jax.ShapeDtypeStruct((N_pad, 1), jnp.float32),
        grid_spec=pltpu.PrefetchScalarGridSpec(
            num_scalar_prefetch=0,
            grid=(G, KC),
            in_specs=[
                pl.BlockSpec((row_block, 1), lambda i, kc: (i, 0)),            # gids
                pl.BlockSpec((B_pad, feat_block), lambda i, kc: (0, kc)),      # preds
                pl.BlockSpec((row_block, feat_block), lambda i, kc: (i, kc)),  # targets
            ],
            out_specs=pl.BlockSpec((row_block, 1), lambda i, kc: (i, 0)),
            scratch_shapes=[pltpu.VMEM((row_block, 1), jnp.float32)],
        ),
        compiler_params=pltpu.CompilerParams(
            dimension_semantics=("parallel", "arbitrary"),
            vmem_limit_bytes=vmem_limit),
        cost_estimate=cost,
    )(gid_col, preds2, tgts2)

    return out[:N, 0]  # (N,) f32, padded tail rows discarded


def all_thre_mse_loss(preds, targets, lengths, threshold, cal_type="min",
                      row_block=None, feat_block=None):
    assert cal_type in {"min", "all"}
    lengths = [int(l) for l in lengths]
    assert all(l > 0 for l in lengths), "empty groups are not supported"
    B = preds.shape[0]
    assert len(lengths) == B
    N = int(sum(lengths))
    assert targets.shape[0] == N

    group_ids_np = np.repeat(np.arange(B, dtype=np.int32), lengths)
    all_mse = _per_row_mse(preds, targets, group_ids_np,
                           row_block=row_block, feat_block=feat_block)
    gid_dev = jnp.asarray(group_ids_np)

    # Tiny ragged per-group reductions on (N,)/(B,) vectors: plain-JAX segment ops.
    if cal_type == "min":
        mse = jax.ops.segment_min(all_mse, gid_dev, num_segments=B,
                                  indices_are_sorted=True)
        if threshold is not None:
            mse = jnp.where(mse > threshold, mse, jnp.float32(0.0))
        return jnp.mean(mse)
    else:
        mse = all_mse
        if threshold is not None:
            mse = jnp.where(mse > threshold, mse, jnp.float32(0.0))
        sums = jax.ops.segment_sum(mse, gid_dev, num_segments=B,
                                   indices_are_sorted=True)
        counts = jnp.asarray(lengths, dtype=jnp.float32)
        return jnp.mean(sums / counts)


def _reference(preds, targets, lengths, threshold, cal_type):
    """Pure-JAX reference mirroring the PyTorch forward."""
    lengths = [int(l) for l in lengths]
    N = int(sum(lengths))
    preds_rep = jnp.repeat(preds, jnp.asarray(lengths), axis=0,
                           total_repeat_length=N)
    all_mse = jnp.mean((preds_rep - targets) ** 2, axis=(1, 2))
    offsets = np.concatenate([[0], np.cumsum(lengths)])
    B = preds.shape[0]
    if cal_type == "min":
        mse = jnp.stack(
            [jnp.min(all_mse[offsets[b]:offsets[b + 1]]) for b in range(B)])
    else:
        mse = all_mse
    if threshold is not None:
        mse = jnp.where(mse > threshold, mse, 0.0)
    if cal_type == "min":
        return jnp.mean(mse)
    return jnp.mean(jnp.stack(
        [jnp.mean(mse[offsets[b]:offsets[b + 1]]) for b in range(B)]))


if __name__ == "__main__":
    key = jax.random.PRNGKey(0)
    k1, k2, k3, k4, k5, k6 = jax.random.split(key, 6)

    # Case 1: S*D = 256 already lane-aligned; single grid step; threshold & None.
    B, S, D = 3, 8, 32
    lengths = [2, 4, 3]
    N = sum(lengths)
    preds = jax.random.normal(k1, (B, S, D), dtype=jnp.float32)
    targets = jax.random.normal(k2, (N, S, D), dtype=jnp.float32)
    for cal_type in ("min", "all"):
        for threshold in (0.5, None):
            loss = jax.block_until_ready(
                all_thre_mse_loss(preds, targets, lengths, threshold, cal_type))
            ref = _reference(preds, targets, lengths, threshold, cal_type)
            np.testing.assert_allclose(np.asarray(loss), np.asarray(ref),
                                       rtol=1e-5, atol=1e-5)

    # Case 2: feature padding (5*24=120 -> 128) and multiple row blocks (G>1).
    B2, S2, D2 = 2, 5, 24
    lengths2 = [7, 6]
    N2 = sum(lengths2)
    preds2 = jax.random.normal(k3, (B2, S2, D2), dtype=jnp.float32)
    targets2 = jax.random.normal(k4, (N2, S2, D2), dtype=jnp.float32)
    for cal_type in ("min", "all"):
        loss = jax.block_until_ready(
            all_thre_mse_loss(preds2, targets2, lengths2, 0.3, cal_type,
                              row_block=8))
        ref = _reference(preds2, targets2, lengths2, 0.3, cal_type)
        np.testing.assert_allclose(np.asarray(loss), np.asarray(ref),
                                   rtol=1e-5, atol=1e-5)

    # Case 3: forced feature split (F=384, feat_block=128 -> KC=3) exercises
    # the inner "arbitrary" accumulation axis, plus G>1 row blocks.
    B3, S3, D3 = 3, 4, 96
    lengths3 = [3, 5, 4]
    N3 = sum(lengths3)
    preds3 = jax.random.normal(k5, (B3, S3, D3), dtype=jnp.float32)
    targets3 = jax.random.normal(k6, (N3, S3, D3), dtype=jnp.float32)
    for cal_type in ("min", "all"):
        loss = jax.block_until_ready(
            all_thre_mse_loss(preds3, targets3, lengths3, 0.4, cal_type,
                              row_block=8, feat_block=128))
        ref = _reference(preds3, targets3, lengths3, 0.4, cal_type)
        np.testing.assert_allclose(np.asarray(loss), np.asarray(ref),
                                   rtol=1e-5, atol=1e-5)

    print("KERNEL_OK")
</pallas_src>

<mosaic_0001>
module attributes {stable_mosaic.version = 11 : i64} {
  func.func @_row_mse_kernel(%arg0: i32, %arg1: i32, %arg2: memref<16x1xi32, #tpu.memory_space<vmem>>, %arg3: memref<8x256xf32, #tpu.memory_space<vmem>>, %arg4: memref<16x256xf32, #tpu.memory_space<vmem>>, %arg5: memref<16x1xf32, #tpu.memory_space<vmem>>, %arg6: memref<16x1xf32, #tpu.memory_space<vmem>>) attributes {dimension_semantics = [#tpu.dimension_semantics<parallel>, #tpu.dimension_semantics<arbitrary>], iteration_bounds = array<i64: 1, 1>, scalar_prefetch = 0 : i64, scratch_operands = 1 : i64, tpu.core_type = #tpu.core_type<tc>, window_params = [{transform_indices = @transform_0, window_bounds = array<i64: 16, 1>}, {transform_indices = @transform_1, window_bounds = array<i64: 8, 256>}, {transform_indices = @transform_2, window_bounds = array<i64: 16, 256>}, {transform_indices = @transform_3, window_bounds = array<i64: 16, 1>}]} {
    %c0_i32 = arith.constant 0 : i32
    %0 = arith.cmpi eq, %arg1, %c0_i32 : i32
    %1 = arith.extui %0 : i1 to i32
    %c0_i32_0 = arith.constant 0 : i32
    %2 = arith.cmpi ne, %1, %c0_i32_0 : i32
    scf.if %2 {
      %cst_13 = arith.constant 0.000000e+00 : f32
      %22 = vector.broadcast %cst_13 : f32 to vector<16x1xf32>
      %c0_14 = arith.constant 0 : index
      %c0_15 = arith.constant 0 : index
      %23 = vector.load %arg6[%c0_14, %c0_15] : memref<16x1xf32, #tpu.memory_space<vmem>>, vector<16x1xf32>
      tpu.vector_store %arg6[%c0_14, %c0_15], %22 {strides = array<i32>} : memref<16x1xf32, #tpu.memory_space<vmem>>, vector<16x1xf32>,
    } else {
    }
    %c0 = arith.constant 0 : index
    %c0_1 = arith.constant 0 : index
    %3 = vector.load %arg2[%c0, %c0_1] : memref<16x1xi32, #tpu.memory_space<vmem>>, vector<16x1xi32>
    %c0_2 = arith.constant 0 : index
    %c0_3 = arith.constant 0 : index
    %4 = vector.load %arg3[%c0_2, %c0_3] : memref<8x256xf32, #tpu.memory_space<vmem>>, vector<8x256xf32>
    %c0_4 = arith.constant 0 : index
    %c0_5 = arith.constant 0 : index
    %5 = vector.load %arg4[%c0_4, %c0_5] : memref<16x256xf32, #tpu.memory_space<vmem>>, vector<16x256xf32>
    %6 = tpu.iota {dimensions = array<i32: 1>} : vector<16x8xi32>
    %7 = vector.broadcast %3 : vector<16x1xi32> to vector<16x8xi32>
    %8 = arith.cmpi eq, %7, %6 : vector<16x8xi32>
    %9 = arith.extui %8 : vector<16x8xi1> to vector<16x8xi32>
    %10 = arith.sitofp %9 : vector<16x8xi32> to vector<16x8xf32>
    %cst = arith.constant dense<0.000000e+00> : vector<16x256xf32>
    %11 = tpu.matmul %10, %4, %cst {dimension_numbers = #tpu.dot_dimension_numbers<[1], [0], [0], [1], [0, 0, 1, 1], [], []>, precision = #tpu.contract_precision<fp32>} : vector<16x8xf32>, vector<8x256xf32>, vector<16x256xf32> -> vector<16x256xf32>
    %12 = arith.subf %5, %11 : vector<16x256xf32>
    %c0_6 = arith.constant 0 : index
    %c0_7 = arith.constant 0 : index
    %13 = vector.load %arg6[%c0_6, %c0_7] : memref<16x1xf32, #tpu.memory_space<vmem>>, vector<16x1xf32>
    %14 = arith.mulf %12, %12 : vector<16x256xf32>
    %cst_8 = arith.constant dense<0.000000e+00> : vector<16xf32>
    %15 = vector.multi_reduction <add>, %14, %cst_8 [1] : vector<16x256xf32> to vector<16xf32>
    %16 = vector.shape_cast %15 : vector<16xf32> to vector<16x1xf32>
    %17 = arith.addf %13, %16 : vector<16x1xf32>
    %c0_9 = arith.constant 0 : index
    %c0_10 = arith.constant 0 : index
    %18 = vector.load %arg6[%c0_9, %c0_10] : memref<16x1xf32, #tpu.memory_space<vmem>>, vector<16x1xf32>
    tpu.vector_store %arg6[%c0_9, %c0_10], %17 {strides = array<i32>} : memref<16x1xf32, #tpu.memory_space<vmem>>, vector<16x1xf32>,
    %c0_i32_11 = arith.constant 0 : i32
    %19 = arith.cmpi eq, %arg1, %c0_i32_11 : i32
    %20 = arith.extui %19 : i1 to i32
    %c0_i32_12 = arith.constant 0 : i32
    %21 = arith.cmpi ne, %20, %c0_i32_12 : i32
    scf.if %21 {
      %c0_13 = arith.constant 0 : index
      %c0_14 = arith.constant 0 : index
      %22 = vector.load %arg6[%c0_13, %c0_14] : memref<16x1xf32, #tpu.memory_space<vmem>>, vector<16x1xf32>
      %cst_15 = arith.constant 3.906250e-03 : f32
      %23 = vector.broadcast %cst_15 : f32 to vector<16x1xf32>
      %24 = arith.mulf %22, %23 : vector<16x1xf32>
      %c0_16 = arith.constant 0 : index
      %c0_17 = arith.constant 0 : index
      %25 = vector.load %arg5[%c0_16, %c0_17] : memref<16x1xf32, #tpu.memory_space<vmem>>, vector<16x1xf32>
      tpu.vector_store %arg5[%c0_16, %c0_17], %24 {strides = array<i32>} : memref<16x1xf32, #tpu.memory_space<vmem>>, vector<16x1xf32>,
    } else {
    }
    return
  }
  func.func @transform_0(%arg0: i32, %arg1: i32) -> (i32, i32) {
    %c0_i32 = arith.constant 0 : i32
    %c0_i32_0 = arith.constant 0 : i32
    return %arg0, %c0_i32 : i32, i32
  }
  func.func @transform_1(%arg0: i32, %arg1: i32) -> (i32, i32) {
    %c0_i32 = arith.constant 0 : i32
    %c0_i32_0 = arith.constant 0 : i32
    return %c0_i32, %arg1 : i32, i32
  }
  func.func @transform_2(%arg0: i32, %arg1: i32) -> (i32, i32) {
    %c0_i32 = arith.constant 0 : i32
    return %arg0, %arg1 : i32, i32
  }
  func.func @transform_3(%arg0: i32, %arg1: i32) -> (i32, i32) {
    %c0_i32 = arith.constant 0 : i32
    %c0_i32_0 = arith.constant 0 : i32
    return %arg0, %c0_i32 : i32, i32
  }
}

</mosaic_0001>

<llo_original>
// kernel: tpu_custom_call.1
$region0: #{tpu_custom_call.1}
  #allocation0 [shape = 'u32[]', space=smem, size = 0x4, offset = 0x4, fixed_abs, tag = 'smem constant byte address 0x4 - core index']
  #allocation1 [shape = 'u32[72,128]{1,0:T(1,128)}', space=vmem, size = 0x9000, scoped, tag = 'internal scratch']
  #allocation2 [shape = 'f32[16,1]{1,0:T(8,128)}', space=vmem, size = 0x2000, scoped, tag = 'scratch operand']
  %s0 = inlined_call_operand.vmem [shape: s32[16,1], index: 0, kind: input, shape index: {}]
  %s1 = inlined_call_operand.vmem [shape: f32[8,256], index: 1, kind: input, shape index: {}]
  %s2 = inlined_call_operand.hbm [shape: f32[16,256], index: 2, kind: input, shape index: {}]
  %s3 = inlined_call_operand.vmem [shape: f32[16,1], index: 3, kind: output, shape index: {}]
  %s4 = sld [smem:[#allocation0]]
  $region34: #{tpu_custom_call.1} parent=0
    _
  %s6 = ssub.s32 1, %s4
  %s7 = scalar_select 0, %s6, %s4
  $region1: #{tpu_custom_call.1} parent=0
    #allocation3 [shape = 'u8[16384]{0}', space=vmem, size = 0x4000, scoped, tag = 'input window, operand 2, single buffered']
    #allocation4 [shape = 's32[1]{0}', space=sflag, size = 0x4, scoped, tag = 'scoped memory for tpu_custom_call.1']
    %8 = vsyncpa [#allocation4], 0
    // Predicated region
    $region2: #{tpu_custom_call.1} parent=1 // pred_check
      _
    $region3: #{tpu_custom_call.1} parent=1 // pred_check_branch
      %10 = sbr.rel (0) target = $region5
    $region4: #{tpu_custom_call.1} parent=1 // pred_region
      _
    $region5: #{tpu_custom_call.1} parent=1 // pred_fallthru
      _
    // Predicated region
    $region6: #{tpu_custom_call.1} parent=1 // pred_check
      _
    $region7: #{tpu_custom_call.1} parent=1 // pred_check_branch
      %12 = sbr.rel (0) target = $region9
    $region8: #{tpu_custom_call.1} parent=1 // pred_region
      _
    $region9: #{tpu_custom_call.1} parent=1 // pred_fallthru
      _
    // Predicated region
    $region10: #{tpu_custom_call.1} parent=1 // pred_check
      _
    $region11: #{tpu_custom_call.1} parent=1 // pred_check_branch
      %14 = sbr.rel (0) target = $region13
    $region12: #{tpu_custom_call.1} parent=1 // pred_region
      %16 = vsyncadd [#allocation4], 0
      %s17 = sshll.u32 %s2, 4
      %s18 = int_to_ptr.hbm [resolvable:$true] %s17
      %s19 = sshll.u32 [#allocation3], 4
      %s20 = int_to_ptr.vmem [resolvable:$true] %s19
      %25 = dma.hbm_to_vmem [thread:$0]  %s18, 512, %s20, [#allocation4], 256, 256, 16
    $region13: #{tpu_custom_call.1} parent=1 // pred_fallthru
      _
    // Predicated region
    $region14: #{tpu_custom_call.1} parent=1 // pred_check
      _
    $region15: #{tpu_custom_call.1} parent=1 // pred_check_branch
      %27 = sbr.rel (0) target = $region17
    $region16: #{tpu_custom_call.1} parent=1 // pred_region
      %29 = dma.done [#allocation4], 512
    $region17: #{tpu_custom_call.1} parent=1 // pred_fallthru
      _
    %p30 = scmp.eq.s32.totalorder 0, 0
    // Predicated region
    $region18: #{tpu_custom_call.1} parent=1 // pred_check
      %p31 = pneg %p30
    $region19: #{tpu_custom_call.1} parent=1 // pred_check_branch
      %33 = sbr.rel (%p31) target = $region21
    $region20: #{tpu_custom_call.1} parent=1 // pred_region
      %vm34 = vcmask 7168
      %35 = vst.msk [vmem:[#allocation2] sm:$0xff] %vm34, 0.0
      %36 = vst.msk [vmem:[#allocation2 + $0x8] sm:$0xff] %vm34, 0.0
    $region21: #{tpu_custom_call.1} parent=1 // pred_fallthru
      _
    %v37 = vld [vmem:[%s0] sm:$0xff]
    %v38 = vld [vmem:[%s0 + $0x8] sm:$0xff]
    %v39 = vld [vmem:[%s1] sm:$0xff]
    %v40 = vld [vmem:[%s1 + $0x8] sm:$0xff]
    %v41 = vld [vmem:[#allocation3] sm:$0xff]
    %v42 = vld [vmem:[#allocation3 + $0x8] sm:$0xff]
    %v43 = vld [vmem:[#allocation3 + $0x10] sm:$0xff]
    %v44 = vld [vmem:[#allocation3 + $0x18] sm:$0xff]
    %v45 = vlaneseq
    %v46 = vand.u32 %v45, 127
    %47 = vset.pattern.permute.xlu0 0
    %48 = vperm.xlu0 %47, %v37
    %v49 = vpop.permute.xlu0 %48
    %50 = vset.pattern.permute.xlu0 0
    %51 = vperm.xlu0 %50, %v38
    %v52 = vpop.permute.xlu0 %51
    %vm53 = vcmp.eq.s32.totalorder %v49, %v46
    %vm54 = vcmp.eq.s32.totalorder %v52, %v46
    %v55 = vsel %vm53, 1, 0
    %v56 = vsel %vm54, 1, 0
    %v57 = vcvt.s32.f32 %v55
    %v58 = vcvt.s32.f32 %v56
    %vm59 = vcmask 64512
    %v61 = vsel %vm59, %v57, 0
    %v64 = vsel %vm59, %v58, 0
    %66 = vmatpush.msra.mxu0 0.0
    %67 = vmatpush.msra.mxu0 0.0
    %68 = vmatpush.msra.mxu0 0.0
    %69 = vmatpush.msra.mxu0 0.0
    %70 = vmatpush.msra.mxu0 0.0
    %71 = vmatpush.msra.mxu0 0.0
    %72 = vmatpush.msra.mxu0 0.0
    %73 = vmatpush.msra.mxu0 0.0
    %74 = vmatpush.msra.mxu0 0.0
    %75 = vmatpush.msra.mxu0 0.0
    %76 = vmatpush.msra.mxu0 0.0
    %77 = vmatpush.msra.mxu0 0.0
    %78 = vmatpush.msra.mxu0 0.0
    %79 = vmatpush.msra.mxu0 0.0
    %80 = vmatpush.msra.mxu0 0.0
    %v81 = vand.u32 %v39, 4294901760
    %82 = vmatpush.msra.mxu0 %v81
    %v83 = vand.u32 %v61, 4294901760
    %v84 = vsub.f32 %v61, %v83
    %v85 = vand.u32 %v84, 4294901760
    %v86 = vsub.f32 %v84, %v85
    %v87 = vand.u32 %v86, 4294901760
    %88 = vmatmul.f32.gmra.mxu0 %v87
    %v89 = vpop.f32.mrf.mxu0
    %v90 = vadd.f32 0.0, %v89
    %v91 = vand.u32 %v64, 4294901760
    %v92 = vsub.f32 %v64, %v91
    %v93 = vand.u32 %v92, 4294901760
    %v94 = vsub.f32 %v92, %v93
    %v95 = vand.u32 %v94, 4294901760
    %96 = vmatmul.f32.gmra.mxu0 %v95
    %v97 = vpop.f32.mrf.mxu0
    %v98 = vadd.f32 0.0, %v97
    %99 = vdwg.mxu0
    %100 = vmatpush.msra.mxu0 0.0
    %101 = vmatpush.msra.mxu0 0.0
    %102 = vmatpush.msra.mxu0 0.0
    %103 = vmatpush.msra.mxu0 0.0
    %104 = vmatpush.msra.mxu0 0.0
    %105 = vmatpush.msra.mxu0 0.0
    %106 = vmatpush.msra.mxu0 0.0
    %107 = vmatpush.msra.mxu0 0.0
    %108 = vmatpush.msra.mxu0 0.0
    %109 = vmatpush.msra.mxu0 0.0
    %110 = vmatpush.msra.mxu0 0.0
    %111 = vmatpush.msra.mxu0 0.0
    %112 = vmatpush.msra.mxu0 0.0
    %113 = vmatpush.msra.mxu0 0.0
    %114 = vmatpush.msra.mxu0 0.0
    %v115 = vand.u32 %v39, 4294901760
    %v116 = vsub.f32 %v39, %v115
    %v117 = vand.u32 %v116, 4294901760
    %v118 = vsub.f32 %v116, %v117
    %v119 = vand.u32 %v118, 4294901760
    %120 = vmatpush.msra.mxu0 %v119
    %v121 = vand.u32 %v61, 4294901760
    %122 = vmatmul.f32.gmra.mxu0 %v121
    %v123 = vpop.f32.mrf.mxu0
    %v124 = vadd.f32 %v90, %v123
    %v125 = vand.u32 %v64, 4294901760
    %126 = vmatmul.f32.gmra.mxu0 %v125
    %v127 = vpop.f32.mrf.mxu0
    %v128 = vadd.f32 %v98, %v127
    %129 = vdwg.mxu0
    %130 = vmatpush.msra.mxu0 0.0
    %131 = vmatpush.msra.mxu0 0.0
    %132 = vmatpush.msra.mxu0 0.0
    %133 = vmatpush.msra.mxu0 0.0
    %134 = vmatpush.msra.mxu0 0.0
    %135 = vmatpush.msra.mxu0 0.0
    %136 = vmatpush.msra.mxu0 0.0
    %137 = vmatpush.msra.mxu0 0.0
    %138 = vmatpush.msra.mxu0 0.0
    %139 = vmatpush.msra.mxu0 0.0
    %140 = vmatpush.msra.mxu0 0.0
    %141 = vmatpush.msra.mxu0 0.0
    %142 = vmatpush.msra.mxu0 0.0
    %143 = vmatpush.msra.mxu0 0.0
    %144 = vmatpush.msra.mxu0 0.0
    %v145 = vand.u32 %v39, 4294901760
    %v146 = vsub.f32 %v39, %v145
    %147 = vmatpush.msra.mxu0 %v146
    %v148 = vand.u32 %v61, 4294901760
    %v149 = vsub.f32 %v61, %v148
    %150 = vmatmul.f32.gmra.mxu0 %v149
    %v151 = vpop.f32.mrf.mxu0
    %v152 = vadd.f32 %v124, %v151
    %v153 = vand.u32 %v64, 4294901760
    %v154 = vsub.f32 %v64, %v153
    %155 = vmatmul.f32.gmra.mxu0 %v154
    %v156 = vpop.f32.mrf.mxu0
    %v157 = vadd.f32 %v128, %v156
    %158 = vdwg.mxu0
    %159 = vmatpush.msra.mxu0 0.0
    %160 = vmatpush.msra.mxu0 0.0
    %161 = vmatpush.msra.mxu0 0.0
    %162 = vmatpush.msra.mxu0 0.0
    %163 = vmatpush.msra.mxu0 0.0
    %164 = vmatpush.msra.mxu0 0.0
    %165 = vmatpush.msra.mxu0 0.0
    %166 = vmatpush.msra.mxu0 0.0
    %167 = vmatpush.msra.mxu0 0.0
    %168 = vmatpush.msra.mxu0 0.0
    %169 = vmatpush.msra.mxu0 0.0
    %170 = vmatpush.msra.mxu0 0.0
    %171 = vmatpush.msra.mxu0 0.0
    %172 = vmatpush.msra.mxu0 0.0
    %173 = vmatpush.msra.mxu0 0.0
    %v174 = vand.u32 %v39, 4294901760
    %175 = vmatpush.msra.mxu0 %v174
    %v176 = vand.u32 %v61, 4294901760
    %v177 = vsub.f32 %v61, %v176
    %v178 = vand.u32 %v177, 4294901760
    %179 = vmatmul.f32.gmra.mxu0 %v178
    %v180 = vpop.f32.mrf.mxu0
    %v181 = vadd.f32 %v152, %v180
    %v182 = vand.u32 %v64, 4294901760
    %v183 = vsub.f32 %v64, %v182
    %v184 = vand.u32 %v183, 4294901760
    %185 = vmatmul.f32.gmra.mxu0 %v184
    %v186 = vpop.f32.mrf.mxu0
    %v187 = vadd.f32 %v157, %v186
    %188 = vdwg.mxu0
    %189 = vmatpush.msra.mxu0 0.0
    %190 = vmatpush.msra.mxu0 0.0
    %191 = vmatpush.msra.mxu0 0.0
    %192 = vmatpush.msra.mxu0 0.0
    %193 = vmatpush.msra.mxu0 0.0
    %194 = vmatpush.msra.mxu0 0.0
    %195 = vmatpush.msra.mxu0 0.0
    %196 = vmatpush.msra.mxu0 0.0
    %197 = vmatpush.msra.mxu0 0.0
    %198 = vmatpush.msra.mxu0 0.0
    %199 = vmatpush.msra.mxu0 0.0
    %200 = vmatpush.msra.mxu0 0.0
    %201 = vmatpush.msra.mxu0 0.0
    %202 = vmatpush.msra.mxu0 0.0
    %203 = vmatpush.msra.mxu0 0.0
    %v204 = vand.u32 %v39, 4294901760
    %v205 = vsub.f32 %v39, %v204
    %v206 = vand.u32 %v205, 4294901760
    %207 = vmatpush.msra.mxu0 %v206
    %v208 = vand.u32 %v61, 4294901760
    %209 = vmatmul.f32.gmra.mxu0 %v208
    %v210 = vpop.f32.mrf.mxu0
    %v211 = vadd.f32 %v181, %v210
    %v212 = vand.u32 %v64, 4294901760
    %213 = vmatmul.f32.gmra.mxu0 %v212
    %v214 = vpop.f32.mrf.mxu0
    %v215 = vadd.f32 %v187, %v214
    %216 = vdwg.mxu0
    %217 = vmatpush.msra.mxu0 0.0
    %218 = vmatpush.msra.mxu0 0.0
    %219 = vmatpush.msra.mxu0 0.0
    %220 = vmatpush.msra.mxu0 0.0
    %221 = vmatpush.msra.mxu0 0.0
    %222 = vmatpush.msra.mxu0 0.0
    %223 = vmatpush.msra.mxu0 0.0
    %224 = vmatpush.msra.mxu0 0.0
    %225 = vmatpush.msra.mxu0 0.0
    %226 = vmatpush.msra.mxu0 0.0
    %227 = vmatpush.msra.mxu0 0.0
    %228 = vmatpush.msra.mxu0 0.0
    %229 = vmatpush.msra.mxu0 0.0
    %230 = vmatpush.msra.mxu0 0.0
    %231 = vmatpush.msra.mxu0 0.0
    %v232 = vand.u32 %v39, 4294901760
    %233 = vmatpush.msra.mxu0 %v232
    %v234 = vand.u32 %v61, 4294901760
    %235 = vmatmul.f32.gmra.mxu0 %v234
    %v236 = vpop.f32.mrf.mxu0
    %v237 = vadd.f32 %v211, %v236
    %v238 = vand.u32 %v64, 4294901760
    %239 = vmatmul.f32.gmra.mxu0 %v238
    %v240 = vpop.f32.mrf.mxu0
    %v241 = vadd.f32 %v215, %v240
    %242 = vdwg.mxu0
    %243 = vmatpush.msra.mxu0 0.0
    %244 = vmatpush.msra.mxu0 0.0
    %245 = vmatpush.msra.mxu0 0.0
    %246 = vmatpush.msra.mxu0 0.0
    %247 = vmatpush.msra.mxu0 0.0
    %248 = vmatpush.msra.mxu0 0.0
    %249 = vmatpush.msra.mxu0 0.0
    %250 = vmatpush.msra.mxu0 0.0
    %251 = vmatpush.msra.mxu0 0.0
    %252 = vmatpush.msra.mxu0 0.0
    %253 = vmatpush.msra.mxu0 0.0
    %254 = vmatpush.msra.mxu0 0.0
    %255 = vmatpush.msra.mxu0 0.0
    %256 = vmatpush.msra.mxu0 0.0
    %257 = vmatpush.msra.mxu0 0.0
    %v258 = vand.u32 %v40, 4294901760
    %259 = vmatpush.msra.mxu0 %v258
    %v260 = vand.u32 %v61, 4294901760
    %v261 = vsub.f32 %v61, %v260
    %v262 = vand.u32 %v261, 4294901760
    %v263 = vsub.f32 %v261, %v262
    %v264 = vand.u32 %v263, 4294901760
    %265 = vmatmul.f32.gmra.mxu0 %v264
    %v266 = vpop.f32.mrf.mxu0
    %v267 = vadd.f32 0.0, %v266
    %v268 = vand.u32 %v64, 4294901760
    %v269 = vsub.f32 %v64, %v268
    %v270 = vand.u32 %v269, 4294901760
    %v271 = vsub.f32 %v269, %v270
    %v272 = vand.u32 %v271, 4294901760
    %273 = vmatmul.f32.gmra.mxu0 %v272
    %v274 = vpop.f32.mrf.mxu0
    %v275 = vadd.f32 0.0, %v274
    %276 = vdwg.mxu0
    %277 = vmatpush.msra.mxu0 0.0
    %278 = vmatpush.msra.mxu0 0.0
    %279 = vmatpush.msra.mxu0 0.0
    %280 = vmatpush.msra.mxu0 0.0
    %281 = vmatpush.msra.mxu0 0.0
    %282 = vmatpush.msra.mxu0 0.0
    %283 = vmatpush.msra.mxu0 0.0
    %284 = vmatpush.msra.mxu0 0.0
    %285 = vmatpush.msra.mxu0 0.0
    %286 = vmatpush.msra.mxu0 0.0
    %287 = vmatpush.msra.mxu0 0.0
    %288 = vmatpush.msra.mxu0 0.0
    %289 = vmatpush.msra.mxu0 0.0
    %290 = vmatpush.msra.mxu0 0.0
    %291 = vmatpush.msra.mxu0 0.0
    %v292 = vand.u32 %v40, 4294901760
    %v293 = vsub.f32 %v40, %v292
    %v294 = vand.u32 %v293, 4294901760
    %v295 = vsub.f32 %v293, %v294
    %v296 = vand.u32 %v295, 4294901760
    %297 = vmatpush.msra.mxu0 %v296
    %v298 = vand.u32 %v61, 4294901760
    %299 = vmatmul.f32.gmra.mxu0 %v298
    %v300 = vpop.f32.mrf.mxu0
    %v301 = vadd.f32 %v267, %v300
    %v302 = vand.u32 %v64, 4294901760
    %303 = vmatmul.f32.gmra.mxu0 %v302
    %v304 = vpop.f32.mrf.mxu0
    %v305 = vadd.f32 %v275, %v304
    %306 = vdwg.mxu0
    %307 = vmatpush.msra.mxu0 0.0
    %308 = vmatpush.msra.mxu0 0.0
    %309 = vmatpush.msra.mxu0 0.0
    %310 = vmatpush.msra.mxu0 0.0
    %311 = vmatpush.msra.mxu0 0.0
    %312 = vmatpush.msra.mxu0 0.0
    %313 = vmatpush.msra.mxu0 0.0
    %314 = vmatpush.msra.mxu0 0.0
    %315 = vmatpush.msra.mxu0 0.0
    %316 = vmatpush.msra.mxu0 0.0
    %317 = vmatpush.msra.mxu0 0.0
    %318 = vmatpush.msra.mxu0 0.0
    %319 = vmatpush.msra.mxu0 0.0
    %320 = vmatpush.msra.mxu0 0.0
    %321 = vmatpush.msra.mxu0 0.0
    %v322 = vand.u32 %v40, 4294901760
    %v323 = vsub.f32 %v40, %v322
    %324 = vmatpush.msra.mxu0 %v323
    %v325 = vand.u32 %v61, 4294901760
    %v326 = vsub.f32 %v61, %v325
    %327 = vmatmul.f32.gmra.mxu0 %v326
    %v328 = vpop.f32.mrf.mxu0
    %v329 = vadd.f32 %v301, %v328
    %v330 = vand.u32 %v64, 4294901760
    %v331 = vsub.f32 %v64, %v330
    %332 = vmatmul.f32.gmra.mxu0 %v331
    %v333 = vpop.f32.mrf.mxu0
    %v334 = vadd.f32 %v305, %v333
    %335 = vdwg.mxu0
    %336 = vmatpush.msra.mxu0 0.0
    %337 = vmatpush.msra.mxu0 0.0
    %338 = vmatpush.msra.mxu0 0.0
    %339 = vmatpush.msra.mxu0 0.0
    %340 = vmatpush.msra.mxu0 0.0
    %341 = vmatpush.msra.mxu0 0.0
    %342 = vmatpush.msra.mxu0 0.0
    %343 = vmatpush.msra.mxu0 0.0
    %344 = vmatpush.msra.mxu0 0.0
    %345 = vmatpush.msra.mxu0 0.0
    %346 = vmatpush.msra.mxu0 0.0
    %347 = vmatpush.msra.mxu0 0.0
    %348 = vmatpush.msra.mxu0 0.0
    %349 = vmatpush.msra.mxu0 0.0
    %350 = vmatpush.msra.mxu0 0.0
    %v351 = vand.u32 %v40, 4294901760
    %352 = vmatpush.msra.mxu0 %v351
    %v353 = vand.u32 %v61, 4294901760
    %v354 = vsub.f32 %v61, %v353
    %v355 = vand.u32 %v354, 4294901760
    %356 = vmatmul.f32.gmra.mxu0 %v355
    %v357 = vpop.f32.mrf.mxu0
    %v358 = vadd.f32 %v329, %v357
    %v359 = vand.u32 %v64, 4294901760
    %v360 = vsub.f32 %v64, %v359
    %v361 = vand.u32 %v360, 4294901760
    %362 = vmatmul.f32.gmra.mxu0 %v361
    %v363 = vpop.f32.mrf.mxu0
    %v364 = vadd.f32 %v334, %v363
    %365 = vdwg.mxu0
    %366 = vmatpush.msra.mxu0 0.0
    %367 = vmatpush.msra.mxu0 0.0
    %368 = vmatpush.msra.mxu0 0.0
    %369 = vmatpush.msra.mxu0 0.0
    %370 = vmatpush.msra.mxu0 0.0
    %371 = vmatpush.msra.mxu0 0.0
    %372 = vmatpush.msra.mxu0 0.0
    %373 = vmatpush.msra.mxu0 0.0
    %374 = vmatpush.msra.mxu0 0.0
    %375 = vmatpush.msra.mxu0 0.0
    %376 = vmatpush.msra.mxu0 0.0
    %377 = vmatpush.msra.mxu0 0.0
    %378 = vmatpush.msra.mxu0 0.0
    %379 = vmatpush.msra.mxu0 0.0
    %380 = vmatpush.msra.mxu0 0.0
    %v381 = vand.u32 %v40, 4294901760
    %v382 = vsub.f32 %v40, %v381
    %v383 = vand.u32 %v382, 4294901760
    %384 = vmatpush.msra.mxu0 %v383
    %v385 = vand.u32 %v61, 4294901760
    %386 = vmatmul.f32.gmra.mxu0 %v385
    %v387 = vpop.f32.mrf.mxu0
    %v388 = vadd.f32 %v358, %v387
    %v389 = vand.u32 %v64, 4294901760
    %390 = vmatmul.f32.gmra.mxu0 %v389
    %v391 = vpop.f32.mrf.mxu0
    %v392 = vadd.f32 %v364, %v391
    %393 = vdwg.mxu0
    %394 = vmatpush.msra.mxu0 0.0
    %395 = vmatpush.msra.mxu0 0.0
    %396 = vmatpush.msra.mxu0 0.0
    %397 = vmatpush.msra.mxu0 0.0
    %398 = vmatpush.msra.mxu0 0.0
    %399 = vmatpush.msra.mxu0 0.0
    %400 = vmatpush.msra.mxu0 0.0
    %401 = vmatpush.msra.mxu0 0.0
    %402 = vmatpush.msra.mxu0 0.0
    %403 = vmatpush.msra.mxu0 0.0
    %404 = vmatpush.msra.mxu0 0.0
    %405 = vmatpush.msra.mxu0 0.0
    %406 = vmatpush.msra.mxu0 0.0
    %407 = vmatpush.msra.mxu0 0.0
    %408 = vmatpush.msra.mxu0 0.0
    %v409 = vand.u32 %v40, 4294901760
    %410 = vmatpush.msra.mxu0 %v409
    %v411 = vand.u32 %v61, 4294901760
    %412 = vmatmul.f32.gmra.mxu0 %v411
    %v413 = vpop.f32.mrf.mxu0
    %v414 = vadd.f32 %v388, %v413
    %v415 = vand.u32 %v64, 4294901760
    %416 = vmatmul.f32.gmra.mxu0 %v415
    %v417 = vpop.f32.mrf.mxu0
    %v418 = vadd.f32 %v392, %v417
    %419 = vdwg.mxu0
    %v420 = vsub.f32 %v41, %v237
    %v421 = vsub.f32 %v42, %v414
    %v422 = vsub.f32 %v43, %v241
    %v423 = vsub.f32 %v44, %v418
    %v424 = vld [vmem:[#allocation2] sm:$0xff]
    %v425 = vld [vmem:[#allocation2 + $0x8] sm:$0xff]
    %v426 = vmul.f32 %v420, %v420
    %v427 = vmul.f32 %v421, %v421
    %v428 = vmul.f32 %v422, %v422
    %v429 = vmul.f32 %v423, %v423
    %v430 = vadd.f32 %v426, %v427
    %431 = vadd.xlane.f32.xlu0 %v430
    %v432 = vpop.xlane.xlu0 %431
    %v433 = vadd.f32 %v428, %v429
    %434 = vadd.xlane.f32.xlu0 %v433
    %v435 = vpop.xlane.xlu0 %434
    %v436 = vadd.f32 %v424, %v432
    %v437 = vadd.f32 %v425, %v435
    %vm438 = vcmask 7168
    %439 = vst.msk [vmem:[#allocation2] sm:$0xff] %vm438, %v436
    %440 = vst.msk [vmem:[#allocation2 + $0x8] sm:$0xff] %vm438, %v437
    // Predicated region
    $region22: #{tpu_custom_call.1} parent=1 // pred_check
      %p441 = pneg %p30
    $region23: #{tpu_custom_call.1} parent=1 // pred_check_branch
      %443 = sbr.rel (%p441) target = $region25
    $region24: #{tpu_custom_call.1} parent=1 // pred_region
      %v444 = vld [vmem:[#allocation2] sm:$0xff]
      %v445 = vld [vmem:[#allocation2 + $0x8] sm:$0xff]
      %v446 = vmul.f32 %v444, 0.00390625
      %v447 = vmul.f32 %v445, 0.00390625
      %448 = vst.msk [vmem:[%s3] sm:$0xff] %vm438, %v446
      %449 = vst.msk [vmem:[%s3 + $0x8] sm:$0xff] %vm438, %v447
    $region25: #{tpu_custom_call.1} parent=1 // pred_fallthru
      _
    // Predicated region
    $region26: #{tpu_custom_call.1} parent=1 // pred_check
      _
    $region27: #{tpu_custom_call.1} parent=1 // pred_check_branch
      %451 = sbr.rel (0) target = $region29
    $region28: #{tpu_custom_call.1} parent=1 // pred_region
      _
    $region29: #{tpu_custom_call.1} parent=1 // pred_fallthru
      _
    // Predicated region
    $region30: #{tpu_custom_call.1} parent=1 // pred_check
      _
    $region31: #{tpu_custom_call.1} parent=1 // pred_check_branch
      %453 = sbr.rel (0) target = $region33
    $region32: #{tpu_custom_call.1} parent=1 // pred_region
      _
    $region33: #{tpu_custom_call.1} parent=1 // pred_fallthru
      _
    %454 = vsyncpa [#allocation4], 1

</llo_original>
